<compile_context>
chip_gen: v7x
topology: tpu7x:2x2x1
jax: 0.10.0
libtpu: 0.0.40
codegen_flags: <defaults>
</compile_context>

<pallas_src>
import functools

import jax
import jax.numpy as jnp
from jax.experimental import pallas as pl
from jax.experimental.pallas import tpu as pltpu

LN_EPS = 1e-5  # torch.nn.LayerNorm default


def _layer_norm(x, w, b):
    mu = jnp.mean(x, axis=-1, keepdims=True)
    var = jnp.mean(jnp.square(x - mu), axis=-1, keepdims=True)
    return (x - mu) * jax.lax.rsqrt(var + LN_EPS) * w + b


# ----------------------------------------------------------------------------
# Kernel 1: clip -> (clip_length * dim_embedding) linear, pipelined over d_out
# ----------------------------------------------------------------------------
def linear_kernel(x_ref, w_ref, b_ref, o_ref):
    o_ref[...] = (
        jnp.dot(x_ref[...], w_ref[...], preferred_element_type=jnp.float32)
        + b_ref[...]
    ).astype(o_ref.dtype)


def run_linear(x, w, b, tn=1920):
    """x: (B, d_in) f32; w: (d_in, d_out) bf16; b: (1, d_out) f32."""
    B, d_in = x.shape
    d_out = w.shape[1]
    tn = min(tn, d_out)            # weight-DMA bound: few, large d_out tiles
    x = x.astype(w.dtype)          # cast once here, not per grid step
    return pl.pallas_call(
        linear_kernel,
        out_shape=jax.ShapeDtypeStruct((B, d_out), jnp.float32),
        grid=(pl.cdiv(d_out, tn),),
        in_specs=[
            pl.BlockSpec((B, d_in), lambda j: (0, 0)),
            pl.BlockSpec((d_in, tn), lambda j: (0, j)),   # weight tiled over d_out
            pl.BlockSpec((1, tn), lambda j: (0, j)),
        ],
        out_specs=pl.BlockSpec((B, tn), lambda j: (0, j)),
        compiler_params=pltpu.CompilerParams(dimension_semantics=("parallel",)),
    )(x, w, b)


# ----------------------------------------------------------------------------
# Kernel 2: the whole transformer stack (num_layers pre-LN attention + MLP
# layers) in ONE pallas_call.  Grid axis = layer index; activations live in a
# VMEM scratch carried across layer iterations; layer l+1's weights are
# prefetched (double-buffered BlockSpecs) while layer l computes.
# ----------------------------------------------------------------------------
def layer_stack_kernel(num_heads, bsz, seq_len, clip_length,
                       h_ref, pref_ref,
                       ln1w_ref, ln1b_ref, wq_ref, wk_ref, wv_ref,
                       wp_ref, bp_ref, ln2w_ref, ln2b_ref,
                       w1_ref, b1_ref, w2_ref, b2_ref,
                       o_ref, act_ref):
    layer = pl.program_id(0)
    C = act_ref.shape[-1]
    n_prefix = seq_len - clip_length
    M = bsz * seq_len
    hd = C // num_heads
    scale = float(hd) ** -0.5

    # Layer 0: assemble [linear-mapped clip tokens ; broadcast prefix_const]
    # directly into the VMEM-resident activation slab (fused "assemble" step).
    @pl.when(layer == 0)
    def _():
        act_ref[:, :clip_length, :] = h_ref[...]
        act_ref[:, clip_length:, :] = jnp.broadcast_to(
            pref_ref[...][None], (bsz, n_prefix, C))

    x = act_ref[...].reshape(M, C)                      # f32 dense (M, C) slab

    # ---- self-attention branch (bias=False on q/k/v, bias=True on project) ----
    xn = _layer_norm(x, ln1w_ref[...], ln1b_ref[...])   # f32 elementwise
    xn_b = xn.astype(wq_ref.dtype)                      # bf16 MXU operand
    q = jnp.dot(xn_b, wq_ref[...], preferred_element_type=jnp.float32)   # (M, C)
    k = jnp.dot(xn_b, wk_ref[...], preferred_element_type=jnp.float32)
    v = jnp.dot(xn_b, wv_ref[...], preferred_element_type=jnp.float32)

    q3 = q.reshape(bsz, seq_len, C)
    k3 = k.reshape(bsz, seq_len, C)
    v3 = v.reshape(bsz, seq_len, C)

    # Per-head scores / PV via single-batch-dim einsums (no key transpose);
    # head outputs are re-merged once and projected with ONE K=C matmul.
    heads = []
    for hh in range(num_heads):                         # static unroll
        lo = hh * hd
        qh = q3[:, :, lo:lo + hd]                       # (bsz, N, hd)
        kh = k3[:, :, lo:lo + hd]
        vh = v3[:, :, lo:lo + hd]
        s = jnp.einsum('bqd,bkd->bqk', qh, kh,
                       preferred_element_type=jnp.float32) * scale  # (bsz, N, N)
        s = s - jnp.max(s, axis=-1, keepdims=True)      # softmax over keys
        p = jnp.exp(s)
        p = p * pl.reciprocal(jnp.sum(p, axis=-1, keepdims=True), approx=True)
        heads.append(jnp.einsum('bqk,bkd->bqd', p, vh,
                                preferred_element_type=jnp.float32))
    o_heads = jnp.concatenate(heads, axis=-1).reshape(M, C)          # re-merge
    attn = jnp.dot(o_heads.astype(wp_ref.dtype), wp_ref[...],
                   preferred_element_type=jnp.float32) + bp_ref[...]
    x = x + attn                                        # residual 1

    # ---- MLP branch (fc1 -> relu -> fc2), dropout = 0.0 ----
    xn2 = _layer_norm(x, ln2w_ref[...], ln2b_ref[...])
    h1 = jnp.dot(xn2.astype(w1_ref.dtype), w1_ref[...],
                 preferred_element_type=jnp.float32) + b1_ref[...]
    h1 = jnp.maximum(h1, 0.0)
    h2 = jnp.dot(h1.astype(w2_ref.dtype), w2_ref[...],
                 preferred_element_type=jnp.float32) + b2_ref[...]
    x = x + h2                                          # residual 2

    act_ref[...] = x.reshape(bsz, seq_len, C)           # carry to next layer

    @pl.when(layer == pl.num_programs(0) - 1)
    def _():
        # Only the prefix rows [clip:] are the module output.
        o_ref[...] = x.reshape(bsz, seq_len, C)[:, clip_length:, :]


def run_transformer_stack(h, prefix, params, num_heads, clip_length,
                          vmem_limit_bytes=48 * 1024 * 1024):
    B, clip, C = h.shape
    P = prefix.shape[0]
    N = clip + P
    L = params["wq"].shape[0]
    H = params["w1"].shape[2]

    def per_layer(shape):
        # Squeeze the stacked layer axis; layer grid index picks the block.
        nd = len(shape)
        return pl.BlockSpec((None,) + tuple(shape), lambda l: (l,) + (0,) * nd)

    def const(shape):
        nd = len(shape)
        return pl.BlockSpec(tuple(shape), lambda l: (0,) * nd)

    kernel = functools.partial(layer_stack_kernel, num_heads, B, N, clip_length)
    return pl.pallas_call(
        kernel,
        out_shape=jax.ShapeDtypeStruct((B, P, C), jnp.float32),
        grid=(L,),
        in_specs=[
            const((B, clip, C)),                    # mapped clip tokens (layer 0)
            const((P, C)),                          # prefix_const (layer 0)
            per_layer((1, C)), per_layer((1, C)),   # ln1 w, b
            per_layer((C, C)), per_layer((C, C)), per_layer((C, C)),  # Wq Wk Wv
            per_layer((C, C)), per_layer((1, C)),   # Wproj, bproj
            per_layer((1, C)), per_layer((1, C)),   # ln2 w, b
            per_layer((C, H)), per_layer((1, H)),   # fc1
            per_layer((H, C)), per_layer((1, C)),   # fc2
        ],
        out_specs=const((B, P, C)),
        scratch_shapes=[pltpu.VMEM((B, N, C), jnp.float32)],   # resident acts
        compiler_params=pltpu.CompilerParams(
            # Layers are sequentially dependent through the activation scratch.
            dimension_semantics=("arbitrary",),
            vmem_limit_bytes=vmem_limit_bytes),
    )(h, prefix,
      params["ln1_w"], params["ln1_b"],
      params["wq"], params["wk"], params["wv"], params["wp"], params["bp"],
      params["ln2_w"], params["ln2_b"],
      params["w1"], params["b1"], params["w2"], params["b2"])


# ----------------------------------------------------------------------------
# TransformerMapper forward: linear -> fused(assemble + layer stack) -> prefix
# ----------------------------------------------------------------------------
def transformer_mapper_forward(x, params, clip_length, dim_embedding, num_heads):
    B = x.shape[0]
    C = dim_embedding
    h = run_linear(x, params["lin_w"], params["lin_b"])      # (B, clip*C) f32
    h = h.reshape(B, clip_length, C)
    return run_transformer_stack(h, params["prefix_const"], params,
                                 num_heads, clip_length)     # (B, P, C)


def init_params(key, dim_clip, dim_embedding, prefix_length, clip_length,
                num_layers, mlp_ratio=2.0):
    C = dim_embedding
    H = int(C * mlp_ratio)
    L = num_layers
    keys = iter(jax.random.split(key, 9))

    def nrm(shape, scale=0.02, dtype=jnp.bfloat16):
        return (scale * jax.random.normal(next(keys), shape)).astype(dtype)

    return {
        "lin_w": nrm((dim_clip, clip_length * C)),                    # bf16
        "lin_b": nrm((1, clip_length * C), dtype=jnp.float32),
        "prefix_const": jax.random.normal(
            next(keys), (prefix_length, C), dtype=jnp.float32),
        # Per-layer weights stacked along a leading [num_layers] axis.
        "ln1_w": jnp.ones((L, 1, C), jnp.float32),
        "ln1_b": jnp.zeros((L, 1, C), jnp.float32),
        "wq": nrm((L, C, C)),       # bf16, bias=False
        "wk": nrm((L, C, C)),       # bf16 (to_keys_values columns [:C])
        "wv": nrm((L, C, C)),       # bf16 (to_keys_values columns [C:])
        "wp": nrm((L, C, C)),       # bf16, bias below
        "bp": jnp.zeros((L, 1, C), jnp.float32),
        "ln2_w": jnp.ones((L, 1, C), jnp.float32),
        "ln2_b": jnp.zeros((L, 1, C), jnp.float32),
        "w1": nrm((L, C, H)),       # bf16
        "b1": jnp.zeros((L, 1, H), jnp.float32),
        "w2": nrm((L, H, C)),       # bf16
        "b2": jnp.zeros((L, 1, C), jnp.float32),
    }


if __name__ == "__main__":
    # Small, forward-consistent shapes.
    B = 2
    dim_clip = 64
    dim_embedding = 32
    prefix_length = 8
    clip_length = 8
    num_layers = 2      # (module default is 8; kept small for the demo)
    num_heads = 8       # fixed by TransformerMapper.__init__

    key = jax.random.PRNGKey(0)
    kp, kx = jax.random.split(key)
    params = init_params(kp, dim_clip, dim_embedding, prefix_length,
                         clip_length, num_layers)
    x = jax.random.normal(kx, (B, dim_clip), dtype=jnp.float32)

    out = transformer_mapper_forward(x, params, clip_length, dim_embedding,
                                     num_heads)
    out = jax.block_until_ready(out)
    assert out.shape == (B, prefix_length, dim_embedding), out.shape
    assert bool(jnp.all(jnp.isfinite(out)))
    print("KERNEL_OK")
</pallas_src>

<mosaic_0001>
module attributes {stable_mosaic.version = 11 : i64} {
  func.func @linear_kernel(%arg0: i32, %arg1: memref<2x64xbf16, #tpu.memory_space<vmem>>, %arg2: memref<64x256xbf16, #tpu.memory_space<vmem>>, %arg3: memref<1x256xf32, #tpu.memory_space<vmem>>, %arg4: memref<2x256xf32, #tpu.memory_space<vmem>>) attributes {dimension_semantics = [#tpu.dimension_semantics<parallel>], iteration_bounds = array<i64: 1>, scalar_prefetch = 0 : i64, scratch_operands = 0 : i64, tpu.core_type = #tpu.core_type<tc>, window_params = [{pipeline_mode = #tpu.pipeline_mode<synchronous>, transform_indices = @transform_0, window_bounds = array<i64: 2, 64>}, {transform_indices = @transform_1, window_bounds = array<i64: 64, 256>}, {transform_indices = @transform_2, window_bounds = array<i64: 1, 256>}, {transform_indices = @transform_3, window_bounds = array<i64: 2, 256>}]} {
    %c0 = arith.constant 0 : index
    %c0_0 = arith.constant 0 : index
    %0 = vector.load %arg1[%c0, %c0_0] : memref<2x64xbf16, #tpu.memory_space<vmem>>, vector<2x64xbf16>
    %c0_1 = arith.constant 0 : index
    %c0_2 = arith.constant 0 : index
    %1 = vector.load %arg2[%c0_1, %c0_2] : memref<64x256xbf16, #tpu.memory_space<vmem>>, vector<64x256xbf16>
    %cst = arith.constant dense<0.000000e+00> : vector<2x256xf32>
    %2 = tpu.matmul %0, %1, %cst {dimension_numbers = #tpu.dot_dimension_numbers<[1], [0], [0], [1], [0, 0, 1, 1], [], []>} : vector<2x64xbf16>, vector<64x256xbf16>, vector<2x256xf32> -> vector<2x256xf32>
    %c0_3 = arith.constant 0 : index
    %c0_4 = arith.constant 0 : index
    %3 = vector.load %arg3[%c0_3, %c0_4] : memref<1x256xf32, #tpu.memory_space<vmem>>, vector<1x256xf32>
    %4 = vector.broadcast %3 : vector<1x256xf32> to vector<2x256xf32>
    %5 = arith.addf %2, %4 : vector<2x256xf32>
    %c0_5 = arith.constant 0 : index
    %c0_6 = arith.constant 0 : index
    %6 = vector.load %arg4[%c0_5, %c0_6] : memref<2x256xf32, #tpu.memory_space<vmem>>, vector<2x256xf32>
    tpu.vector_store %arg4[%c0_5, %c0_6], %5 {strides = array<i32>} : memref<2x256xf32, #tpu.memory_space<vmem>>, vector<2x256xf32>,
    return
  }
  func.func @transform_0(%arg0: i32) -> (i32, i32) {
    %c0_i32 = arith.constant 0 : i32
    %c0_i32_0 = arith.constant 0 : i32
    %c0_i32_1 = arith.constant 0 : i32
    return %c0_i32, %c0_i32_0 : i32, i32
  }
  func.func @transform_1(%arg0: i32) -> (i32, i32) {
    %c0_i32 = arith.constant 0 : i32
    %c0_i32_0 = arith.constant 0 : i32
    return %c0_i32, %arg0 : i32, i32
  }
  func.func @transform_2(%arg0: i32) -> (i32, i32) {
    %c0_i32 = arith.constant 0 : i32
    %c0_i32_0 = arith.constant 0 : i32
    return %c0_i32, %arg0 : i32, i32
  }
  func.func @transform_3(%arg0: i32) -> (i32, i32) {
    %c0_i32 = arith.constant 0 : i32
    %c0_i32_0 = arith.constant 0 : i32
    return %c0_i32, %arg0 : i32, i32
  }
}

</mosaic_0001>

<llo_original>
// kernel: tpu_custom_call.1
$region0: #{tpu_custom_call.1}
  #allocation0 [shape = 'u32[]', space=smem, size = 0x4, offset = 0x4, fixed_abs, tag = 'smem constant byte address 0x4 - core index']
  #allocation1 [shape = 'u32[144,128]{1,0:T(1,128)}', space=vmem, size = 0x12000, scoped, tag = 'internal scratch']
  %s0 = inlined_call_operand.hbm [shape: bf16[2,64], index: 0, kind: input, shape index: {}]
  %s1 = inlined_call_operand.hbm [shape: bf16[64,256], index: 1, kind: input, shape index: {}]
  %s2 = inlined_call_operand.vmem [shape: f32[1,256], index: 2, kind: input, shape index: {}]
  %s3 = inlined_call_operand.hbm [shape: f32[2,256], index: 3, kind: output, shape index: {}]
  %s4 = sld [smem:[#allocation0]]
  $region30: #{tpu_custom_call.1} parent=0
    _
  %s6 = ssub.s32 1, %s4
  %s7 = scalar_select 0, %s6, %s4
  $region1: #{tpu_custom_call.1} parent=0
    #allocation2 [shape = 'u8[512]{0}', space=vmem, size = 0x400, scoped, tag = 'input window, operand 0, single buffered']
    #allocation3 [shape = 's32[1]{0}', space=sflag, size = 0x4, scoped, tag = 'scoped memory for tpu_custom_call.1']
    #allocation4 [shape = 's32[1]{0}', space=sflag, size = 0x4, scoped, tag = 'scoped memory for tpu_custom_call.1']
    #allocation5 [shape = 'u8[32768]{0}', space=vmem, size = 0x8000, scoped, tag = 'input window, operand 1, single buffered']
    #allocation6 [shape = 's32[1]{0}', space=sflag, size = 0x4, scoped, tag = 'scoped memory for tpu_custom_call.1']
    #allocation7 [shape = 'u8[2048]{0}', space=vmem, size = 0x800, scoped, tag = 'output window, operand 0, single buffered']
    %8 = vsyncpa [#allocation3], 0
    %9 = vsyncpa [#allocation6], 0
    %10 = vsyncpa [#allocation4], 0
    // Predicated region
    $region2: #{tpu_custom_call.1} parent=1 // pred_check
      _
    $region3: #{tpu_custom_call.1} parent=1 // pred_check_branch
      %12 = sbr.rel (0) target = $region5
    $region4: #{tpu_custom_call.1} parent=1 // pred_region
      %s14 = ssub.s32 16, 16
      %15 = vsyncadd [#allocation3], %s14
      %s17 = sshll.u32 [#allocation2], 4
      %s18 = int_to_ptr.vmem [resolvable:$true] %s17
      %20 = dma.hbm_to_vmem [thread:$0]  %s0, 16, %s18, [#allocation3]
    $region5: #{tpu_custom_call.1} parent=1 // pred_fallthru
      _
    // Predicated region
    $region6: #{tpu_custom_call.1} parent=1 // pred_check
      _
    $region7: #{tpu_custom_call.1} parent=1 // pred_check_branch
      %22 = sbr.rel (0) target = $region9
    $region8: #{tpu_custom_call.1} parent=1 // pred_region
      %s24 = ssub.s32 1024, 1024
      %25 = vsyncadd [#allocation6], %s24
      %s26 = sshll.u32 [#allocation5], 4
      %s27 = int_to_ptr.vmem [resolvable:$true] %s26
      %32 = dma.hbm_to_vmem [thread:$0]  %s1, 1024, %s27, [#allocation6], 128, 128, 8
    $region9: #{tpu_custom_call.1} parent=1 // pred_fallthru
      _
    // Predicated region
    $region10: #{tpu_custom_call.1} parent=1 // pred_check
      _
    $region11: #{tpu_custom_call.1} parent=1 // pred_check_branch
      %34 = sbr.rel (0) target = $region13
    $region12: #{tpu_custom_call.1} parent=1 // pred_region
      _
    $region13: #{tpu_custom_call.1} parent=1 // pred_fallthru
      _
    // Predicated region
    $region14: #{tpu_custom_call.1} parent=1 // pred_check
      _
    $region15: #{tpu_custom_call.1} parent=1 // pred_check_branch
      %36 = sbr.rel (0) target = $region17
    $region16: #{tpu_custom_call.1} parent=1 // pred_region
      %37 = dma.done [#allocation3], 16
    $region17: #{tpu_custom_call.1} parent=1 // pred_fallthru
      _
    // Predicated region
    $region18: #{tpu_custom_call.1} parent=1 // pred_check
      _
    $region19: #{tpu_custom_call.1} parent=1 // pred_check_branch
      %39 = sbr.rel (0) target = $region21
    $region20: #{tpu_custom_call.1} parent=1 // pred_region
      %40 = dma.done [#allocation6], 1024
    $region21: #{tpu_custom_call.1} parent=1 // pred_fallthru
      _
    %v42 = vld [vmem:[#allocation2] sm:$0x1]
    %v43 = vld [vmem:[#allocation5] sm:$0xff]
    %v44 = vld [vmem:[#allocation5 + $0x8] sm:$0xff]
    %v45 = vld [vmem:[#allocation5 + $0x10] sm:$0xff]
    %v46 = vld [vmem:[#allocation5 + $0x18] sm:$0xff]
    %v47 = vld [vmem:[#allocation5 + $0x20] sm:$0xff]
    %v48 = vld [vmem:[#allocation5 + $0x28] sm:$0xff]
    %v49 = vld [vmem:[#allocation5 + $0x30] sm:$0xff]
    %v50 = vld [vmem:[#allocation5 + $0x38] sm:$0xff]
    %v51 = vld [vmem:[%s2] sm:$0x3]
    %v53 = vlaneseq
    %v54 = vshrl.u32 %v53, 7
    %v55 = vsub.s32 0, %v54
    %v56 = vrot.slane %v51, %v55
    %v57 = vlaneseq
    %v58 = vshrl.u32 %v57, 7
    %v59 = vsub.s32 1, %v58
    %v60 = vrot.slane %v51, %v59
    %v71 = vunpack.c.l.b16 %v43
    %v72 = vunpack.c.h.b16 %v43
    %v73 = vunpack.c.l.b16 %v44
    %v74 = vunpack.c.h.b16 %v44
    %v75 = vunpack.c.l.b16 %v45
    %v76 = vunpack.c.h.b16 %v45
    %v77 = vunpack.c.l.b16 %v46
    %v78 = vunpack.c.h.b16 %v46
    %v79 = vunpack.c.l.b16 %v47
    %v80 = vunpack.c.h.b16 %v47
    %v81 = vunpack.c.l.b16 %v48
    %v82 = vunpack.c.h.b16 %v48
    %v83 = vunpack.c.l.b16 %v49
    %v84 = vunpack.c.h.b16 %v49
    %v85 = vunpack.c.l.b16 %v50
    %v86 = vunpack.c.h.b16 %v50
    %v87 = vpack.c.b16 %v73, %v71
    %v88 = vpack.c.b16 %v74, %v72
    %v89 = vpack.c.b16 %v77, %v75
    %v90 = vpack.c.b16 %v78, %v76
    %v91 = vpack.c.b16 %v81, %v79
    %v92 = vpack.c.b16 %v82, %v80
    %v93 = vpack.c.b16 %v85, %v83
    %v94 = vpack.c.b16 %v86, %v84
    %vm103 = vcmask 523264
    %v105 = vsel %vm103, %v42, 0
    %107 = vmatprep.subr.bf16.mxu0 %v88
    %108 = vmatpush1.bf16.msra.mxu0 %v87
    %109 = vmatprep.subr.bf16.mxu0 %v90
    %110 = vmatpush1.bf16.msra.mxu0 %v89
    %111 = vmatprep.subr.bf16.mxu0 %v92
    %112 = vmatpush1.bf16.msra.mxu0 %v91
    %113 = vmatprep.subr.bf16.mxu0 %v94
    %114 = vmatpush1.bf16.msra.mxu0 %v93
    %115 = vmatprep.subr.bf16.mxu0 0
    %116 = vmatpush1.bf16.msra.mxu0 0
    %117 = vmatprep.subr.bf16.mxu0 0
    %118 = vmatpush1.bf16.msra.mxu0 0
    %119 = vmatprep.subr.bf16.mxu0 0
    %120 = vmatpush1.bf16.msra.mxu0 0
    %121 = vmatprep.subr.bf16.mxu0 0
    %122 = vmatpush1.bf16.msra.mxu0 0
    %123 = vmatprep.subr.bf16.mxu0 0
    %124 = vmatpush1.bf16.msra.mxu0 0
    %125 = vmatprep.subr.bf16.mxu0 0
    %126 = vmatpush1.bf16.msra.mxu0 0
    %127 = vmatprep.subr.bf16.mxu0 0
    %128 = vmatpush1.bf16.msra.mxu0 0
    %129 = vmatprep.subr.bf16.mxu0 0
    %130 = vmatpush1.bf16.msra.mxu0 0
    %131 = vmatprep.subr.bf16.mxu0 0
    %132 = vmatpush1.bf16.msra.mxu0 0
    %133 = vmatprep.subr.bf16.mxu0 0
    %134 = vmatpush1.bf16.msra.mxu0 0
    %135 = vmatprep.subr.bf16.mxu0 0
    %136 = vmatpush1.bf16.msra.mxu0 0
    %137 = vmatprep.subr.bf16.mxu0 0
    %138 = vmatpush1.bf16.msra.mxu0 0
    %139 = vmatprep.mubr.bf16.mxu0 0
    %140 = vmatmul.mubr.bf16.gmra.mrb[0].mxu0 %v105
    %v141 = vpop.f32.mrb[0].mxu0
    %v142 = vadd.f32 %v56, %v141
    %v143 = vpop.f32.mrb[0].mxu0
    %v144 = vadd.f32 %v60, %v143
    %v145 = vpop.f32.mrb[0].mxu0
    %v146 = vpop.f32.mrb[0].mxu0
    %147 = vdwg.mxu0
    %v150 = vcombine.low %v142, %v144
    %v152 = vunpack.c.l.s4 1983009808
    %v153 = vunpack.c.0.s8 %v152
    %v154 = vlaneseq
    %v155 = vshrl.u32 %v154, 7
    %v156 = vsub.s32 %v153, %v155
    %v157 = vrot.slane %v150, %v156
    %159 = vst [vmem:[#allocation7] sm:$0xf] %v157
    // Predicated region
    $region22: #{tpu_custom_call.1} parent=1 // pred_check
      _
    $region23: #{tpu_custom_call.1} parent=1 // pred_check_branch
      %161 = sbr.rel (0) target = $region25
    $region24: #{tpu_custom_call.1} parent=1 // pred_region
      %s163 = ssub.s32 64, 64
      %164 = vsyncadd [#allocation4], %s163
      %s166 = sshll.u32 [#allocation7], 4
      %s167 = int_to_ptr.vmem [resolvable:$true] %s166
      %169 = dma.vmem_to_hbm [thread:$0]  %s167, 64, %s3, [#allocation4]
    $region25: #{tpu_custom_call.1} parent=1 // pred_fallthru
      _
    // Predicated region
    $region26: #{tpu_custom_call.1} parent=1 // pred_check
      _
    $region27: #{tpu_custom_call.1} parent=1 // pred_check_branch
      %171 = sbr.rel (0) target = $region29
    $region28: #{tpu_custom_call.1} parent=1 // pred_region
      %172 = dma.done [#allocation4], 64
    $region29: #{tpu_custom_call.1} parent=1 // pred_fallthru
      _
    %173 = vsyncpa [#allocation3], 1
    %174 = vsyncpa [#allocation6], 1
    %175 = vsyncpa [#allocation4], 1

</llo_original>
